<compile_context>
chip_gen: v7x
topology: tpu7x:2x2x1
jax: 0.10.0
libtpu: 0.0.40
codegen_flags: <defaults>
</compile_context>

<pallas_src>
import functools

import jax
import jax.numpy as jnp
from jax.experimental import pallas as pl
from jax.experimental.pallas import tpu as pltpu

LANE = 128


def _round_up(v, m):
    return ((v + m - 1) // m) * m


def dqn_mlp_kernel(n_actions,
                   x_ref,
                   w1_ref, b1_ref,
                   w2_ref, b2_ref,
                   w3_ref, b3_ref,
                   w4_ref, b4_ref,
                   q_ref, act_ref):
    """One batch tile of the 4-layer MLP, fully in VMEM.

    Weights are bf16 (MXU-native), accumulation is f32, activations are
    re-quantized to bf16 between layers. The padded (lane-aligned) q slab is
    written lane-dense; the greedy action (first-index argmax over the real
    action columns only) is computed in-kernel on VPU/XLU slots.
    """
    x = x_ref[...].astype(jnp.bfloat16)                       # (TB, state_dim)

    h = jnp.dot(x, w1_ref[...], preferred_element_type=jnp.float32) + b1_ref[...]
    h = jnp.maximum(h, 0.0).astype(jnp.bfloat16)              # (TB, 256)

    h = jnp.dot(h, w2_ref[...], preferred_element_type=jnp.float32) + b2_ref[...]
    h = jnp.maximum(h, 0.0).astype(jnp.bfloat16)              # (TB, 256)

    h = jnp.dot(h, w3_ref[...], preferred_element_type=jnp.float32) + b3_ref[...]
    h = jnp.maximum(h, 0.0).astype(jnp.bfloat16)              # (TB, 128)

    q = jnp.dot(h, w4_ref[...], preferred_element_type=jnp.float32) + b4_ref[...]
    q_ref[...] = q                                            # (TB, 128) lane-dense

    # Greedy action: argmax over the real (unpadded) action columns, lowest
    # index wins ties (matches numpy/torch argmax).
    col = jax.lax.broadcasted_iota(jnp.int32, q.shape, 1)
    neg = jnp.finfo(jnp.float32).min
    q_valid = jnp.where(col < n_actions, q, neg)
    q_max = jnp.max(q_valid, axis=-1, keepdims=True)
    cand = jnp.where(q_valid == q_max, col, q.shape[-1])
    act_ref[...] = jnp.min(cand, axis=-1, keepdims=True).astype(jnp.int32)


def init_linear(key, fan_in, fan_out):
    """Deterministic init mirroring torch.nn.Linear default (uniform +-1/sqrt(fan_in)).
    Weight is stored as (in, out); bias as (1, out)."""
    kw, kb = jax.random.split(key)
    bound = 1.0 / jnp.sqrt(jnp.float32(fan_in))
    w = jax.random.uniform(kw, (fan_in, fan_out), jnp.float32, -bound, bound)
    b = jax.random.uniform(kb, (1, fan_out), jnp.float32, -bound, bound)
    return w, b


def make_params(state_dim, n_actions, key):
    dims = [(state_dim, 192), (192, 256), (256, 64), (64, n_actions)]
    keys = jax.random.split(key, len(dims))
    return [init_linear(k, fi, fo) for k, (fi, fo) in zip(keys, dims)]


def pad_params_for_tpu(params):
    """Zero-pad every layer's output width to a multiple of 128 lanes (and the
    next layer's input rows to match), cast weights to bf16, keep biases f32.
    Zero padding is numerically exact for this ReLU MLP."""
    padded = []
    prev_out = None
    for idx, (w, b) in enumerate(params):
        fi, fo = w.shape
        fi_p = fi if idx == 0 else prev_out
        fo_p = _round_up(fo, LANE)
        wp = jnp.zeros((fi_p, fo_p), jnp.float32).at[:fi, :fo].set(w)
        bp = jnp.zeros((1, fo_p), jnp.float32).at[:, :fo].set(b)
        padded.append((wp.astype(jnp.bfloat16), bp))
        prev_out = fo_p
    return padded


def dqn_forward(x, padded_params, n_actions, *, block_b=512):
    """Returns (qvalues (B, n_actions) f32, greedy_actions (B,) int32)."""
    (w1, b1), (w2, b2), (w3, b3), (w4, b4) = padded_params
    B, state_dim = x.shape
    out_p = w4.shape[1]

    tb = min(block_b, _round_up(B, 8))          # batch tile (rows), multiple of 8
    b_pad = _round_up(B, tb)
    grid = (b_pad // tb,)
    if b_pad != B:
        x = jnp.pad(x, ((0, b_pad - B), (0, 0)))

    def resident(arr):
        # Full-array block, same block index every grid step -> stays in VMEM.
        return pl.BlockSpec(arr.shape, lambda i: (0, 0))

    flops = 2 * B * (state_dim * 192 + 192 * 256 + 256 * 64 + 64 * n_actions)
    bytes_accessed = (
        x.size * 4
        + sum(w.size * 2 + b.size * 4 for w, b in padded_params)
        + b_pad * out_p * 4
        + b_pad * 4)

    q_pad, act_pad = pl.pallas_call(
        functools.partial(dqn_mlp_kernel, n_actions),
        grid=grid,
        in_specs=[pl.BlockSpec((tb, state_dim), lambda i: (i, 0)),
                  resident(w1), resident(b1),
                  resident(w2), resident(b2),
                  resident(w3), resident(b3),
                  resident(w4), resident(b4)],
        out_specs=(pl.BlockSpec((tb, out_p), lambda i: (i, 0)),
                   pl.BlockSpec((tb, 1), lambda i: (i, 0))),
        out_shape=(jax.ShapeDtypeStruct((b_pad, out_p), jnp.float32),
                   jax.ShapeDtypeStruct((b_pad, 1), jnp.int32)),
        compiler_params=pltpu.CompilerParams(
            dimension_semantics=("parallel",)),
        cost_estimate=pl.CostEstimate(
            flops=flops, transcendentals=0, bytes_accessed=bytes_accessed),
    )(x, w1, b1, w2, b2, w3, b3, w4, b4)

    return q_pad[:B, :n_actions], act_pad[:B, 0]


def reference_forward(x, padded_params, n_actions):
    """Pure-JAX f32 reference using the same bf16-rounded weights/activations."""
    h = x.astype(jnp.bfloat16).astype(jnp.float32)
    n = len(padded_params)
    for i, (w, b) in enumerate(padded_params):
        h = h @ w.astype(jnp.float32) + b
        if i < n - 1:
            h = jnp.maximum(h, 0.0).astype(jnp.bfloat16).astype(jnp.float32)
    return h[:, :n_actions]


if __name__ == "__main__":
    key = jax.random.PRNGKey(0)
    k_params, k_x1, k_x2 = jax.random.split(key, 3)

    # CartPole-like setup: state_shape=(4,), n_actions=2.
    state_dim, n_actions = 4, 2
    params = make_params(state_dim, n_actions, k_params)
    padded = pad_params_for_tpu(params)

    # Small acting batch (single tile).
    x_small = jax.random.normal(k_x1, (8, state_dim), jnp.float32)
    q_small, a_small = dqn_forward(x_small, padded, n_actions)
    q_small, a_small = jax.block_until_ready((q_small, a_small))

    ref_q = reference_forward(x_small, padded, n_actions)
    assert q_small.shape == (8, n_actions)
    assert jnp.allclose(q_small, ref_q, atol=1e-3, rtol=1e-3), "q mismatch (small)"
    assert jnp.array_equal(a_small, jnp.argmax(ref_q, axis=-1)), "argmax mismatch (small)"

    # Larger, non-multiple batch: exercises the batch grid (3 tiles),
    # resident-weight reuse across grid steps, and batch padding.
    x_big = jax.random.normal(k_x2, (130, state_dim), jnp.float32)
    q_big, a_big = dqn_forward(x_big, padded, n_actions, block_b=64)
    q_big, a_big = jax.block_until_ready((q_big, a_big))
    ref_qb = reference_forward(x_big, padded, n_actions)
    assert q_big.shape == (130, n_actions)
    assert jnp.allclose(q_big, ref_qb, atol=1e-3, rtol=1e-3), "q mismatch (big)"
    assert jnp.array_equal(a_big, jnp.argmax(ref_qb, axis=-1)), "argmax mismatch (big)"

    # TODO(synk): epsilon-greedy exploration mix (random action w.p. epsilon) and
    # the online+target-network training step (shared weight fetch) remain
    # host/JAX glue; only the forward + greedy argmax is kernelized here.
    print("KERNEL_OK")
</pallas_src>

<mosaic_0001>
module attributes {stable_mosaic.version = 11 : i64} {
  func.func @dqn_mlp_kernel(%arg0: i32, %arg1: memref<8x4xf32, #tpu.memory_space<vmem>>, %arg2: memref<4x256xbf16, #tpu.memory_space<vmem>>, %arg3: memref<1x256xf32, #tpu.memory_space<vmem>>, %arg4: memref<256x256xbf16, #tpu.memory_space<vmem>>, %arg5: memref<1x256xf32, #tpu.memory_space<vmem>>, %arg6: memref<256x128xbf16, #tpu.memory_space<vmem>>, %arg7: memref<1x128xf32, #tpu.memory_space<vmem>>, %arg8: memref<128x128xbf16, #tpu.memory_space<vmem>>, %arg9: memref<1x128xf32, #tpu.memory_space<vmem>>, %arg10: memref<8x128xf32, #tpu.memory_space<vmem>>, %arg11: memref<8x1xi32, #tpu.memory_space<vmem>>) attributes {dimension_semantics = [#tpu.dimension_semantics<parallel>], iteration_bounds = array<i64: 1>, scalar_prefetch = 0 : i64, scratch_operands = 0 : i64, tpu.core_type = #tpu.core_type<tc>, window_params = [{transform_indices = @transform_0, window_bounds = array<i64: 8, 4>}, {pipeline_mode = #tpu.pipeline_mode<synchronous>, transform_indices = @transform_1, window_bounds = array<i64: 4, 256>}, {pipeline_mode = #tpu.pipeline_mode<synchronous>, transform_indices = @transform_2, window_bounds = array<i64: 1, 256>}, {pipeline_mode = #tpu.pipeline_mode<synchronous>, transform_indices = @transform_3, window_bounds = array<i64: 256, 256>}, {pipeline_mode = #tpu.pipeline_mode<synchronous>, transform_indices = @transform_4, window_bounds = array<i64: 1, 256>}, {pipeline_mode = #tpu.pipeline_mode<synchronous>, transform_indices = @transform_5, window_bounds = array<i64: 256, 128>}, {pipeline_mode = #tpu.pipeline_mode<synchronous>, transform_indices = @transform_6, window_bounds = array<i64: 1, 128>}, {pipeline_mode = #tpu.pipeline_mode<synchronous>, transform_indices = @transform_7, window_bounds = array<i64: 128, 128>}, {pipeline_mode = #tpu.pipeline_mode<synchronous>, transform_indices = @transform_8, window_bounds = array<i64: 1, 128>}, {transform_indices = @transform_9, window_bounds = array<i64: 8, 128>}, {transform_indices = @transform_10, window_bounds = array<i64: 8, 1>}]} {
    %c0 = arith.constant 0 : index
    %c0_0 = arith.constant 0 : index
    %0 = vector.load %arg1[%c0, %c0_0] : memref<8x4xf32, #tpu.memory_space<vmem>>, vector<8x4xf32>
    %1 = arith.truncf %0 : vector<8x4xf32> to vector<8x4xbf16>
    %c0_1 = arith.constant 0 : index
    %c0_2 = arith.constant 0 : index
    %2 = vector.load %arg2[%c0_1, %c0_2] : memref<4x256xbf16, #tpu.memory_space<vmem>>, vector<4x256xbf16>
    %cst = arith.constant dense<0.000000e+00> : vector<8x256xf32>
    %3 = tpu.matmul %1, %2, %cst {dimension_numbers = #tpu.dot_dimension_numbers<[1], [0], [0], [1], [0, 0, 1, 1], [], []>} : vector<8x4xbf16>, vector<4x256xbf16>, vector<8x256xf32> -> vector<8x256xf32>
    %c0_3 = arith.constant 0 : index
    %c0_4 = arith.constant 0 : index
    %4 = vector.load %arg3[%c0_3, %c0_4] : memref<1x256xf32, #tpu.memory_space<vmem>>, vector<1x256xf32>
    %5 = vector.broadcast %4 : vector<1x256xf32> to vector<8x256xf32>
    %6 = arith.addf %3, %5 : vector<8x256xf32>
    %cst_5 = arith.constant 0.000000e+00 : f32
    %7 = vector.broadcast %cst_5 : f32 to vector<8x256xf32>
    %8 = arith.maximumf %6, %7 : vector<8x256xf32>
    %9 = arith.truncf %8 : vector<8x256xf32> to vector<8x256xbf16>
    %c0_6 = arith.constant 0 : index
    %c0_7 = arith.constant 0 : index
    %10 = vector.load %arg4[%c0_6, %c0_7] : memref<256x256xbf16, #tpu.memory_space<vmem>>, vector<256x256xbf16>
    %cst_8 = arith.constant dense<0.000000e+00> : vector<8x256xf32>
    %11 = tpu.matmul %9, %10, %cst_8 {dimension_numbers = #tpu.dot_dimension_numbers<[1], [0], [0], [1], [0, 0, 1, 1], [], []>} : vector<8x256xbf16>, vector<256x256xbf16>, vector<8x256xf32> -> vector<8x256xf32>
    %c0_9 = arith.constant 0 : index
    %c0_10 = arith.constant 0 : index
    %12 = vector.load %arg5[%c0_9, %c0_10] : memref<1x256xf32, #tpu.memory_space<vmem>>, vector<1x256xf32>
    %13 = vector.broadcast %12 : vector<1x256xf32> to vector<8x256xf32>
    %14 = arith.addf %11, %13 : vector<8x256xf32>
    %cst_11 = arith.constant 0.000000e+00 : f32
    %15 = vector.broadcast %cst_11 : f32 to vector<8x256xf32>
    %16 = arith.maximumf %14, %15 : vector<8x256xf32>
    %17 = arith.truncf %16 : vector<8x256xf32> to vector<8x256xbf16>
    %c0_12 = arith.constant 0 : index
    %c0_13 = arith.constant 0 : index
    %18 = vector.load %arg6[%c0_12, %c0_13] : memref<256x128xbf16, #tpu.memory_space<vmem>>, vector<256x128xbf16>
    %cst_14 = arith.constant dense<0.000000e+00> : vector<8x128xf32>
    %19 = tpu.matmul %17, %18, %cst_14 {dimension_numbers = #tpu.dot_dimension_numbers<[1], [0], [0], [1], [0, 0, 1, 1], [], []>} : vector<8x256xbf16>, vector<256x128xbf16>, vector<8x128xf32> -> vector<8x128xf32>
    %c0_15 = arith.constant 0 : index
    %c0_16 = arith.constant 0 : index
    %20 = vector.load %arg7[%c0_15, %c0_16] : memref<1x128xf32, #tpu.memory_space<vmem>>, vector<1x128xf32>
    %21 = vector.broadcast %20 : vector<1x128xf32> to vector<8x128xf32>
    %22 = arith.addf %19, %21 : vector<8x128xf32>
    %cst_17 = arith.constant 0.000000e+00 : f32
    %23 = vector.broadcast %cst_17 : f32 to vector<8x128xf32>
    %24 = arith.maximumf %22, %23 : vector<8x128xf32>
    %25 = arith.truncf %24 : vector<8x128xf32> to vector<8x128xbf16>
    %c0_18 = arith.constant 0 : index
    %c0_19 = arith.constant 0 : index
    %26 = vector.load %arg8[%c0_18, %c0_19] : memref<128x128xbf16, #tpu.memory_space<vmem>>, vector<128x128xbf16>
    %cst_20 = arith.constant dense<0.000000e+00> : vector<8x128xf32>
    %27 = tpu.matmul %25, %26, %cst_20 {dimension_numbers = #tpu.dot_dimension_numbers<[1], [0], [0], [1], [0, 0, 1, 1], [], []>} : vector<8x128xbf16>, vector<128x128xbf16>, vector<8x128xf32> -> vector<8x128xf32>
    %c0_21 = arith.constant 0 : index
    %c0_22 = arith.constant 0 : index
    %28 = vector.load %arg9[%c0_21, %c0_22] : memref<1x128xf32, #tpu.memory_space<vmem>>, vector<1x128xf32>
    %29 = vector.broadcast %28 : vector<1x128xf32> to vector<8x128xf32>
    %30 = arith.addf %27, %29 : vector<8x128xf32>
    %c0_23 = arith.constant 0 : index
    %c0_24 = arith.constant 0 : index
    %31 = vector.load %arg10[%c0_23, %c0_24] : memref<8x128xf32, #tpu.memory_space<vmem>>, vector<8x128xf32>
    tpu.vector_store %arg10[%c0_23, %c0_24], %30 {strides = array<i32>} : memref<8x128xf32, #tpu.memory_space<vmem>>, vector<8x128xf32>,
    %32 = tpu.iota {dimensions = array<i32: 1>} : vector<8x128xi32>
    %c2_i32 = arith.constant 2 : i32
    %33 = vector.broadcast %c2_i32 : i32 to vector<8x128xi32>
    %34 = arith.cmpi slt, %32, %33 : vector<8x128xi32>
    %cst_25 = arith.constant -3.40282347E+38 : f32
    %35 = vector.broadcast %cst_25 : f32 to vector<8x128xf32>
    %36 = arith.select %34, %30, %35 : vector<8x128xi1>, vector<8x128xf32>
    %cst_26 = arith.constant dense<0xFF800000> : vector<8xf32>
    %37 = vector.multi_reduction <maximumf>, %36, %cst_26 [1] : vector<8x128xf32> to vector<8xf32>
    %38 = vector.shape_cast %37 : vector<8xf32> to vector<8x1xf32>
    %39 = vector.broadcast %38 : vector<8x1xf32> to vector<8x128xf32>
    %40 = arith.cmpf oeq, %36, %39 : vector<8x128xf32>
    %c128_i32 = arith.constant 128 : i32
    %41 = vector.broadcast %c128_i32 : i32 to vector<8x128xi32>
    %42 = arith.select %40, %32, %41 : vector<8x128xi1>, vector<8x128xi32>
    %cst_27 = arith.constant dense<2147483647> : vector<8xi32>
    %43 = vector.multi_reduction <minsi>, %42, %cst_27 [1] : vector<8x128xi32> to vector<8xi32>
    %44 = vector.shape_cast %43 : vector<8xi32> to vector<8x1xi32>
    %c0_28 = arith.constant 0 : index
    %c0_29 = arith.constant 0 : index
    %45 = vector.load %arg11[%c0_28, %c0_29] : memref<8x1xi32, #tpu.memory_space<vmem>>, vector<8x1xi32>
    tpu.vector_store %arg11[%c0_28, %c0_29], %44 {strides = array<i32>} : memref<8x1xi32, #tpu.memory_space<vmem>>, vector<8x1xi32>,
    return
  }
  func.func @transform_0(%arg0: i32) -> (i32, i32) {
    %c0_i32 = arith.constant 0 : i32
    %c0_i32_0 = arith.constant 0 : i32
    return %arg0, %c0_i32 : i32, i32
  }
  func.func @transform_1(%arg0: i32) -> (i32, i32) {
    %c0_i32 = arith.constant 0 : i32
    %c0_i32_0 = arith.constant 0 : i32
    %c0_i32_1 = arith.constant 0 : i32
    return %c0_i32, %c0_i32_0 : i32, i32
  }
  func.func @transform_2(%arg0: i32) -> (i32, i32) {
    %c0_i32 = arith.constant 0 : i32
    %c0_i32_0 = arith.constant 0 : i32
    %c0_i32_1 = arith.constant 0 : i32
    return %c0_i32, %c0_i32_0 : i32, i32
  }
  func.func @transform_3(%arg0: i32) -> (i32, i32) {
    %c0_i32 = arith.constant 0 : i32
    %c0_i32_0 = arith.constant 0 : i32
    %c0_i32_1 = arith.constant 0 : i32
    return %c0_i32, %c0_i32_0 : i32, i32
  }
  func.func @transform_4(%arg0: i32) -> (i32, i32) {
    %c0_i32 = arith.constant 0 : i32
    %c0_i32_0 = arith.constant 0 : i32
    %c0_i32_1 = arith.constant 0 : i32
    return %c0_i32, %c0_i32_0 : i32, i32
  }
  func.func @transform_5(%arg0: i32) -> (i32, i32) {
    %c0_i32 = arith.constant 0 : i32
    %c0_i32_0 = arith.constant 0 : i32
    %c0_i32_1 = arith.constant 0 : i32
    return %c0_i32, %c0_i32_0 : i32, i32
  }
  func.func @transform_6(%arg0: i32) -> (i32, i32) {
    %c0_i32 = arith.constant 0 : i32
    %c0_i32_0 = arith.constant 0 : i32
    %c0_i32_1 = arith.constant 0 : i32
    return %c0_i32, %c0_i32_0 : i32, i32
  }
  func.func @transform_7(%arg0: i32) -> (i32, i32) {
    %c0_i32 = arith.constant 0 : i32
    %c0_i32_0 = arith.constant 0 : i32
    %c0_i32_1 = arith.constant 0 : i32
    return %c0_i32, %c0_i32_0 : i32, i32
  }
  func.func @transform_8(%arg0: i32) -> (i32, i32) {
    %c0_i32 = arith.constant 0 : i32
    %c0_i32_0 = arith.constant 0 : i32
    %c0_i32_1 = arith.constant 0 : i32
    return %c0_i32, %c0_i32_0 : i32, i32
  }
  func.func @transform_9(%arg0: i32) -> (i32, i32) {
    %c0_i32 = arith.constant 0 : i32
    %c0_i32_0 = arith.constant 0 : i32
    return %arg0, %c0_i32 : i32, i32
  }
  func.func @transform_10(%arg0: i32) -> (i32, i32) {
    %c0_i32 = arith.constant 0 : i32
    %c0_i32_0 = arith.constant 0 : i32
    return %arg0, %c0_i32 : i32, i32
  }
}

</mosaic_0001>

<llo_original>
// kernel: tpu_custom_call.1
$region0: #{tpu_custom_call.1}
  #allocation0 [shape = 'u32[]', space=smem, size = 0x4, offset = 0x4, fixed_abs, tag = 'smem constant byte address 0x4 - core index']
  #allocation1 [shape = 'u32[144,128]{1,0:T(1,128)}', space=vmem, size = 0x12000, scoped, tag = 'internal scratch']
  %s0 = inlined_call_operand.vmem [shape: f32[8,4], index: 0, kind: input, shape index: {}]
  %s1 = inlined_call_operand.vmem [shape: bf16[4,256], index: 1, kind: input, shape index: {}]
  %s2 = inlined_call_operand.vmem [shape: f32[1,256], index: 2, kind: input, shape index: {}]
  %s3 = inlined_call_operand.hbm [shape: bf16[256,256], index: 3, kind: input, shape index: {}]
  %s4 = inlined_call_operand.vmem [shape: f32[1,256], index: 4, kind: input, shape index: {}]
  %s5 = inlined_call_operand.hbm [shape: bf16[256,128], index: 5, kind: input, shape index: {}]
  %s6 = inlined_call_operand.vmem [shape: f32[1,128], index: 6, kind: input, shape index: {}]
  %s7 = inlined_call_operand.hbm [shape: bf16[128,128], index: 7, kind: input, shape index: {}]
  %s8 = inlined_call_operand.vmem [shape: f32[1,128], index: 8, kind: input, shape index: {}]
  %s9 = inlined_call_operand.hbm [shape: f32[8,128], index: 9, kind: output, shape index: {0}]
  %s10 = inlined_call_operand.vmem [shape: s32[8,1], index: 10, kind: output, shape index: {1}]
  %11 = xla_tuple %s9, %s10
  %s12 = sld [smem:[#allocation0]]
  $region66: #{tpu_custom_call.1} parent=0
    _
  %s14 = ssub.s32 1, %s12
  %s15 = scalar_select 0, %s14, %s12
  $region1: #{tpu_custom_call.1} parent=0
    #allocation2 [shape = 'u8[131072]{0}', space=vmem, size = 0x20000, scoped, tag = 'input window, operand 3, single buffered']
    #allocation3 [shape = 's32[1]{0}', space=sflag, size = 0x4, scoped, tag = 'scoped memory for tpu_custom_call.1']
    #allocation4 [shape = 's32[1]{0}', space=sflag, size = 0x4, scoped, tag = 'scoped memory for tpu_custom_call.1']
    #allocation5 [shape = 'u8[65536]{0}', space=vmem, size = 0x10000, scoped, tag = 'input window, operand 5, single buffered']
    #allocation6 [shape = 's32[1]{0}', space=sflag, size = 0x4, scoped, tag = 'scoped memory for tpu_custom_call.1']
    #allocation7 [shape = 'u8[32768]{0}', space=vmem, size = 0x8000, scoped, tag = 'input window, operand 7, single buffered']
    #allocation8 [shape = 'u8[4096]{0}', space=vmem, size = 0x1000, scoped, tag = 'output window, operand 0, single buffered']
    %16 = vsyncpa [#allocation3], 0
    %17 = vsyncpa [#allocation6], 0
    %18 = vsyncpa [#allocation4], 0
    // Predicated region
    $region2: #{tpu_custom_call.1} parent=1 // pred_check
      _
    $region3: #{tpu_custom_call.1} parent=1 // pred_check_branch
      %20 = sbr.rel (0) target = $region5
    $region4: #{tpu_custom_call.1} parent=1 // pred_region
      _
    $region5: #{tpu_custom_call.1} parent=1 // pred_fallthru
      _
    // Predicated region
    $region6: #{tpu_custom_call.1} parent=1 // pred_check
      _
    $region7: #{tpu_custom_call.1} parent=1 // pred_check_branch
      %22 = sbr.rel (0) target = $region9
    $region8: #{tpu_custom_call.1} parent=1 // pred_region
      _
    $region9: #{tpu_custom_call.1} parent=1 // pred_fallthru
      _
    // Predicated region
    $region10: #{tpu_custom_call.1} parent=1 // pred_check
      _
    $region11: #{tpu_custom_call.1} parent=1 // pred_check_branch
      %24 = sbr.rel (0) target = $region13
    $region12: #{tpu_custom_call.1} parent=1 // pred_region
      _
    $region13: #{tpu_custom_call.1} parent=1 // pred_fallthru
      _
    // Predicated region
    $region14: #{tpu_custom_call.1} parent=1 // pred_check
      _
    $region15: #{tpu_custom_call.1} parent=1 // pred_check_branch
      %26 = sbr.rel (0) target = $region17
    $region16: #{tpu_custom_call.1} parent=1 // pred_region
      %s28 = ssub.s32 4096, 4096
      %29 = vsyncadd [#allocation3], %s28
      %s30 = sshll.u32 [#allocation2], 4
      %s31 = int_to_ptr.vmem [resolvable:$true] %s30
      %36 = dma.hbm_to_vmem [thread:$0]  %s3, 4096, %s31, [#allocation3], 128, 128, 8
    $region17: #{tpu_custom_call.1} parent=1 // pred_fallthru
      _
    // Predicated region
    $region18: #{tpu_custom_call.1} parent=1 // pred_check
      _
    $region19: #{tpu_custom_call.1} parent=1 // pred_check_branch
      %38 = sbr.rel (0) target = $region21
    $region20: #{tpu_custom_call.1} parent=1 // pred_region
      _
    $region21: #{tpu_custom_call.1} parent=1 // pred_fallthru
      _
    // Predicated region
    $region22: #{tpu_custom_call.1} parent=1 // pred_check
      _
    $region23: #{tpu_custom_call.1} parent=1 // pred_check_branch
      %40 = sbr.rel (0) target = $region25
    $region24: #{tpu_custom_call.1} parent=1 // pred_region
      %s42 = ssub.s32 2048, 2048
      %43 = vsyncadd [#allocation6], %s42
      %s44 = sshll.u32 [#allocation5], 4
      %s45 = int_to_ptr.vmem [resolvable:$true] %s44
      %50 = dma.hbm_to_vmem [thread:$0]  %s5, 2048, %s45, [#allocation6], 64, 64, 4
    $region25: #{tpu_custom_call.1} parent=1 // pred_fallthru
      _
    // Predicated region
    $region26: #{tpu_custom_call.1} parent=1 // pred_check
      _
    $region27: #{tpu_custom_call.1} parent=1 // pred_check_branch
      %52 = sbr.rel (0) target = $region29
    $region28: #{tpu_custom_call.1} parent=1 // pred_region
      _
    $region29: #{tpu_custom_call.1} parent=1 // pred_fallthru
      _
    // Predicated region
    $region30: #{tpu_custom_call.1} parent=1 // pred_check
      _
    $region31: #{tpu_custom_call.1} parent=1 // pred_check_branch
      %54 = sbr.rel (0) target = $region33
    $region32: #{tpu_custom_call.1} parent=1 // pred_region
      %s56 = ssub.s32 1024, 1024
      %57 = vsyncadd [#allocation6], %s56
      %s58 = sshll.u32 [#allocation7], 4
      %s59 = int_to_ptr.vmem [resolvable:$true] %s58
      %64 = dma.hbm_to_vmem [thread:$0]  %s7, 1024, %s59, [#allocation6], 64, 64, 4
    $region33: #{tpu_custom_call.1} parent=1 // pred_fallthru
      _
    // Predicated region
    $region34: #{tpu_custom_call.1} parent=1 // pred_check
      _
    $region35: #{tpu_custom_call.1} parent=1 // pred_check_branch
      %66 = sbr.rel (0) target = $region37
    $region36: #{tpu_custom_call.1} parent=1 // pred_region
      _
    $region37: #{tpu_custom_call.1} parent=1 // pred_fallthru
      _
    // Predicated region
    $region38: #{tpu_custom_call.1} parent=1 // pred_check
      _
    $region39: #{tpu_custom_call.1} parent=1 // pred_check_branch
      %68 = sbr.rel (0) target = $region41
    $region40: #{tpu_custom_call.1} parent=1 // pred_region
      %69 = dma.done [#allocation3], 4096
    $region41: #{tpu_custom_call.1} parent=1 // pred_fallthru
      _
    // Predicated region
    $region42: #{tpu_custom_call.1} parent=1 // pred_check
      _
    $region43: #{tpu_custom_call.1} parent=1 // pred_check_branch
      %71 = sbr.rel (0) target = $region45
    $region44: #{tpu_custom_call.1} parent=1 // pred_region
      %72 = dma.done [#allocation6], 2048
    $region45: #{tpu_custom_call.1} parent=1 // pred_fallthru
      _
    // Predicated region
    $region46: #{tpu_custom_call.1} parent=1 // pred_check
      _
    $region47: #{tpu_custom_call.1} parent=1 // pred_check_branch
      %74 = sbr.rel (0) target = $region49
    $region48: #{tpu_custom_call.1} parent=1 // pred_region
      %75 = dma.done [#allocation6], 1024
    $region49: #{tpu_custom_call.1} parent=1 // pred_fallthru
      _
    %v77 = vld [vmem:[%s0] sm:$0xff]
    %v78 = vpack.c.bf16 %v77, %v77
    %v79 = vld [vmem:[%s1] sm:$0xf]
    %v80 = vld [vmem:[%s2] sm:$0x3]
    %v82 = vlaneseq
    %v83 = vshrl.u32 %v82, 7
    %v84 = vsub.s32 0, %v83
    %v85 = vrot.slane %v80, %v84
    %v86 = vlaneseq
    %v87 = vshrl.u32 %v86, 7
    %v88 = vsub.s32 1, %v87
    %v89 = vrot.slane %v80, %v88
    %v94 = vunpack.c.l.s4 1983009808
    %v95 = vunpack.c.0.s8 %v94
    %v96 = vlaneseq
    %v97 = vshrl.u32 %v96, 7
    %v98 = vsub.s32 %v95, %v97
    %v99 = vrot.slane %v79, %v98
    %v100 = vcombine.high %v99, %v99
    %vm101 = vcmask 31744
    %v103 = vsel %vm101, %v78, 0
    %vm105 = vcmask 1041408
    %v107 = vsel %vm105, %v99, 0
    %v110 = vsel %vm105, %v100, 0
    %112 = vmatprep.subr.bf16.mxu0 %v110
    %113 = vmatpush1.bf16.msra.mxu0 %v107
    %114 = vmatprep.subr.bf16.mxu0 0
    %115 = vmatpush1.bf16.msra.mxu0 0
    %116 = vmatprep.subr.bf16.mxu0 0
    %117 = vmatpush1.bf16.msra.mxu0 0
    %118 = vmatprep.subr.bf16.mxu0 0
    %119 = vmatpush1.bf16.msra.mxu0 0
    %120 = vmatprep.subr.bf16.mxu0 0
    %121 = vmatpush1.bf16.msra.mxu0 0
    %122 = vmatprep.subr.bf16.mxu0 0
    %123 = vmatpush1.bf16.msra.mxu0 0
    %124 = vmatprep.subr.bf16.mxu0 0
    %125 = vmatpush1.bf16.msra.mxu0 0
    %126 = vmatprep.subr.bf16.mxu0 0
    %127 = vmatpush1.bf16.msra.mxu0 0
    %128 = vmatprep.subr.bf16.mxu0 0
    %129 = vmatpush1.bf16.msra.mxu0 0
    %130 = vmatprep.subr.bf16.mxu0 0
    %131 = vmatpush1.bf16.msra.mxu0 0
    %132 = vmatprep.subr.bf16.mxu0 0
    %133 = vmatpush1.bf16.msra.mxu0 0
    %134 = vmatprep.subr.bf16.mxu0 0
    %135 = vmatpush1.bf16.msra.mxu0 0
    %136 = vmatprep.subr.bf16.mxu0 0
    %137 = vmatpush1.bf16.msra.mxu0 0
    %138 = vmatprep.subr.bf16.mxu0 0
    %139 = vmatpush1.bf16.msra.mxu0 0
    %140 = vmatprep.subr.bf16.mxu0 0
    %141 = vmatpush1.bf16.msra.mxu0 0
    %142 = vmatprep.subr.bf16.mxu0 0
    %143 = vmatpush1.bf16.msra.mxu0 0
    %144 = vmatprep.mubr.bf16.mxu0 0
    %145 = vmatmul.mubr.bf16.gmra.mrb[0].mxu0 %v103
    %v146 = vpop.f32.mrb[0].mxu0
    %v147 = vadd.f32 %v85, %v146
    %v148 = vpop.f32.mrb[0].mxu0
    %v149 = vadd.f32 %v89, %v148
    %v150 = vpop.f32.mrb[0].mxu0
    %v151 = vpop.f32.mrb[0].mxu0
    %152 = vdwg.mxu0
    %v153 = vmax.f32 %v147, 0.0
    %v154 = vmax.f32 %v149, 0.0
    %v155 = vpack.c.bf16 %v153, %v153
    %v156 = vpack.c.bf16 %v154, %v154
    %v157 = vld [vmem:[#allocation2] sm:$0xff]
    %v158 = vld [vmem:[#allocation2 + $0x8] sm:$0xff]
    %v159 = vld [vmem:[#allocation2 + $0x10] sm:$0xff]
    %v160 = vld [vmem:[#allocation2 + $0x18] sm:$0xff]
    %v161 = vld [vmem:[#allocation2 + $0x20] sm:$0xff]
    %v162 = vld [vmem:[#allocation2 + $0x28] sm:$0xff]
    %v163 = vld [vmem:[#allocation2 + $0x30] sm:$0xff]
    %v164 = vld [vmem:[#allocation2 + $0x38] sm:$0xff]
    %v165 = vld [vmem:[#allocation2 + $0x40] sm:$0xff]
    %v166 = vld [vmem:[#allocation2 + $0x48] sm:$0xff]
    %v167 = vld [vmem:[#allocation2 + $0x50] sm:$0xff]
    %v168 = vld [vmem:[#allocation2 + $0x58] sm:$0xff]
    %v169 = vld [vmem:[#allocation2 + $0x60] sm:$0xff]
    %v170 = vld [vmem:[#allocation2 + $0x68] sm:$0xff]
    %v171 = vld [vmem:[#allocation2 + $0x70] sm:$0xff]
    %v172 = vld [vmem:[#allocation2 + $0x78] sm:$0xff]
    %v173 = vld [vmem:[#allocation2 + $0x80] sm:$0xff]
    %v174 = vld [vmem:[#allocation2 + $0x88] sm:$0xff]
    %v175 = vld [vmem:[#allocation2 + $0x90] sm:$0xff]
    %v176 = vld [vmem:[#allocation2 + $0x98] sm:$0xff]
    %v177 = vld [vmem:[#allocation2 + $0xa0] sm:$0xff]
    %v178 = vld [vmem:[#allocation2 + $0xa8] sm:$0xff]
    %v179 = vld [vmem:[#allocation2 + $0xb0] sm:$0xff]
    %v180 = vld [vmem:[#allocation2 + $0xb8] sm:$0xff]
    %v181 = vld [vmem:[#allocation2 + $0xc0] sm:$0xff]
    %v182 = vld [vmem:[#allocation2 + $0xc8] sm:$0xff]
    %v183 = vld [vmem:[#allocation2 + $0xd0] sm:$0xff]
    %v184 = vld [vmem:[#allocation2 + $0xd8] sm:$0xff]
    %v185 = vld [vmem:[#allocation2 + $0xe0] sm:$0xff]
    %v186 = vld [vmem:[#allocation2 + $0xe8] sm:$0xff]
    %v187 = vld [vmem:[#allocation2 + $0xf0] sm:$0xff]
    %v188 = vld [vmem:[#allocation2 + $0xf8] sm:$0xff]
    %v189 = vld [vmem:[%s4] sm:$0x3]
    %v191 = vlaneseq
    %v192 = vshrl.u32 %v191, 7
    %v193 = vsub.s32 0, %v192
    %v194 = vrot.slane %v189, %v193
    %v195 = vlaneseq
    %v196 = vshrl.u32 %v195, 7
    %v197 = vsub.s32 1, %v196
    %v198 = vrot.slane %v189, %v197
    %v233 = vunpack.c.l.b16 %v157
    %v234 = vunpack.c.h.b16 %v157
    %v235 = vunpack.c.l.b16 %v158
    %v236 = vunpack.c.h.b16 %v158
    %v237 = vunpack.c.l.b16 %v159
    %v238 = vunpack.c.h.b16 %v159
    %v239 = vunpack.c.l.b16 %v160
    %v240 = vunpack.c.h.b16 %v160
    %v241 = vunpack.c.l.b16 %v161
    %v242 = vunpack.c.h.b16 %v161
    %v243 = vunpack.c.l.b16 %v162
    %v244 = vunpack.c.h.b16 %v162
    %v245 = vunpack.c.l.b16 %v163
    %v246 = vunpack.c.h.b16 %v163
    %v247 = vunpack.c.l.b16 %v164
    %v248 = vunpack.c.h.b16 %v164
    %v249 = vunpack.c.l.b16 %v165
    %v250 = vunpack.c.h.b16 %v165
    %v251 = vunpack.c.l.b16 %v166
    %v252 = vunpack.c.h.b16 %v166
    %v253 = vunpack.c.l.b16 %v167
    %v254 = vunpack.c.h.b16 %v167
    %v255 = vunpack.c.l.b16 %v168
    %v256 = vunpack.c.h.b16 %v168
    %v257 = vunpack.c.l.b16 %v169
    %v258 = vunpack.c.h.b16 %v169
    %v259 = vunpack.c.l.b16 %v170
    %v260 = vunpack.c.h.b16 %v170
    %v261 = vunpack.c.l.b16 %v171
    %v262 = vunpack.c.h.b16 %v171
    %v263 = vunpack.c.l.b16 %v172
    %v264 = vunpack.c.h.b16 %v172
    %v265 = vunpack.c.l.b16 %v173
    %v266 = vunpack.c.h.b16 %v173
    %v267 = vunpack.c.l.b16 %v174
    %v268 = vunpack.c.h.b16 %v174
    %v269 = vunpack.c.l.b16 %v175
    %v270 = vunpack.c.h.b16 %v175
    %v271 = vunpack.c.l.b16 %v176
    %v272 = vunpack.c.h.b16 %v176
    %v273 = vunpack.c.l.b16 %v177
    %v274 = vunpack.c.h.b16 %v177
    %v275 = vunpack.c.l.b16 %v178
    %v276 = vunpack.c.h.b16 %v178
    %v277 = vunpack.c.l.b16 %v179
    %v278 = vunpack.c.h.b16 %v179
    %v279 = vunpack.c.l.b16 %v180
    %v280 = vunpack.c.h.b16 %v180
    %v281 = vunpack.c.l.b16 %v181
    %v282 = vunpack.c.h.b16 %v181
    %v283 = vunpack.c.l.b16 %v182
    %v284 = vunpack.c.h.b16 %v182
    %v285 = vunpack.c.l.b16 %v183
    %v286 = vunpack.c.h.b16 %v183
    %v287 = vunpack.c.l.b16 %v184
    %v288 = vunpack.c.h.b16 %v184
    %v289 = vunpack.c.l.b16 %v185
    %v290 = vunpack.c.h.b16 %v185
    %v291 = vunpack.c.l.b16 %v186
    %v292 = vunpack.c.h.b16 %v186
    %v293 = vunpack.c.l.b16 %v187
    %v294 = vunpack.c.h.b16 %v187
    %v295 = vunpack.c.l.b16 %v188
    %v296 = vunpack.c.h.b16 %v188
    %v297 = vpack.c.b16 %v235, %v233
    %v298 = vpack.c.b16 %v236, %v234
    %v299 = vpack.c.b16 %v239, %v237
    %v300 = vpack.c.b16 %v240, %v238
    %v301 = vpack.c.b16 %v243, %v241
    %v302 = vpack.c.b16 %v244, %v242
    %v303 = vpack.c.b16 %v247, %v245
    %v304 = vpack.c.b16 %v248, %v246
    %v305 = vpack.c.b16 %v251, %v249
    %v306 = vpack.c.b16 %v252, %v250
    %v307 = vpack.c.b16 %v255, %v253
    %v308 = vpack.c.b16 %v256, %v254
    %v309 = vpack.c.b16 %v259, %v257
    %v310 = vpack.c.b16 %v260, %v258
    %v311 = vpack.c.b16 %v263, %v261
    %v312 = vpack.c.b16 %v264, %v262
    %v313 = vpack.c.b16 %v267, %v265
    %v314 = vpack.c.b16 %v268, %v266
    %v315 = vpack.c.b16 %v271, %v269
    %v316 = vpack.c.b16 %v272, %v270
    %v317 = vpack.c.b16 %v275, %v273
    %v318 = vpack.c.b16 %v276, %v274
    %v319 = vpack.c.b16 %v279, %v277
    %v320 = vpack.c.b16 %v280, %v278
    %v321 = vpack.c.b16 %v283, %v281
    %v322 = vpack.c.b16 %v284, %v282
    %v323 = vpack.c.b16 %v287, %v285
    %v324 = vpack.c.b16 %v288, %v286
    %v325 = vpack.c.b16 %v291, %v289
    %v326 = vpack.c.b16 %v292, %v290
    %v327 = vpack.c.b16 %v295, %v293
    %v328 = vpack.c.b16 %v296, %v294
    %361 = vmatprep.subr.bf16.mxu0 %v298
    %362 = vmatpush1.bf16.msra.mxu0 %v297
    %363 = vmatprep.subr.bf16.mxu0 %v300
    %364 = vmatpush1.bf16.msra.mxu0 %v299
    %365 = vmatprep.subr.bf16.mxu0 %v302
    %366 = vmatpush1.bf16.msra.mxu0 %v301
    %367 = vmatprep.subr.bf16.mxu0 %v304
    %368 = vmatpush1.bf16.msra.mxu0 %v303
    %369 = vmatprep.subr.bf16.mxu0 %v306
    %370 = vmatpush1.bf16.msra.mxu0 %v305
    %371 = vmatprep.subr.bf16.mxu0 %v308
    %372 = vmatpush1.bf16.msra.mxu0 %v307
    %373 = vmatprep.subr.bf16.mxu0 %v310
    %374 = vmatpush1.bf16.msra.mxu0 %v309
    %375 = vmatprep.subr.bf16.mxu0 %v312
    %376 = vmatpush1.bf16.msra.mxu0 %v311
    %377 = vmatprep.subr.bf16.mxu0 %v314
    %378 = vmatpush1.bf16.msra.mxu0 %v313
    %379 = vmatprep.subr.bf16.mxu0 %v316
    %380 = vmatpush1.bf16.msra.mxu0 %v315
    %381 = vmatprep.subr.bf16.mxu0 %v318
    %382 = vmatpush1.bf16.msra.mxu0 %v317
    %383 = vmatprep.subr.bf16.mxu0 %v320
    %384 = vmatpush1.bf16.msra.mxu0 %v319
    %385 = vmatprep.subr.bf16.mxu0 %v322
    %386 = vmatpush1.bf16.msra.mxu0 %v321
    %387 = vmatprep.subr.bf16.mxu0 %v324
    %388 = vmatpush1.bf16.msra.mxu0 %v323
    %389 = vmatprep.subr.bf16.mxu0 %v326
    %390 = vmatpush1.bf16.msra.mxu0 %v325
    %391 = vmatprep.subr.bf16.mxu0 %v328
    %392 = vmatpush1.bf16.msra.mxu0 %v327
    %393 = vmatprep.mubr.bf16.mxu0 %v156
    %394 = vmatmul.mubr.bf16.gmra.mrb[0].mxu0 %v155
    %v395 = vpop.f32.mrb[0].mxu0
    %v396 = vadd.f32 %v194, %v395
    %v397 = vpop.f32.mrb[0].mxu0
    %v398 = vadd.f32 %v198, %v397
    %v399 = vpop.f32.mrb[0].mxu0
    %v400 = vpop.f32.mrb[0].mxu0
    %401 = vdwg.mxu0
    %v402 = vmax.f32 %v396, 0.0
    %v403 = vmax.f32 %v398, 0.0
    %v404 = vpack.c.bf16 %v402, %v402
    %v405 = vpack.c.bf16 %v403, %v403
    %v406 = vld [vmem:[#allocation5] sm:$0xf]
    %v407 = vld [vmem:[#allocation5 + $0x4] sm:$0xf]
    %v408 = vld [vmem:[#allocation5 + $0x8] sm:$0xf]
    %v409 = vld [vmem:[#allocation5 + $0xc] sm:$0xf]
    %v410 = vld [vmem:[#allocation5 + $0x10] sm:$0xf]
    %v411 = vld [vmem:[#allocation5 + $0x14] sm:$0xf]
    %v412 = vld [vmem:[#allocation5 + $0x18] sm:$0xf]
    %v413 = vld [vmem:[#allocation5 + $0x1c] sm:$0xf]
    %v414 = vld [vmem:[#allocation5 + $0x20] sm:$0xf]
    %v415 = vld [vmem:[#allocation5 + $0x24] sm:$0xf]
    %v416 = vld [vmem:[#allocation5 + $0x28] sm:$0xf]
    %v417 = vld [vmem:[#allocation5 + $0x2c] sm:$0xf]
    %v418 = vld [vmem:[#allocation5 + $0x30] sm:$0xf]
    %v419 = vld [vmem:[#allocation5 + $0x34] sm:$0xf]
    %v420 = vld [vmem:[#allocation5 + $0x38] sm:$0xf]
    %v421 = vld [vmem:[#allocation5 + $0x3c] sm:$0xf]
    %v422 = vld [vmem:[#allocation5 + $0x40] sm:$0xf]
    %v423 = vld [vmem:[#allocation5 + $0x44] sm:$0xf]
    %v424 = vld [vmem:[#allocation5 + $0x48] sm:$0xf]
    %v425 = vld [vmem:[#allocation5 + $0x4c] sm:$0xf]
    %v426 = vld [vmem:[#allocation5 + $0x50] sm:$0xf]
    %v427 = vld [vmem:[#allocation5 + $0x54] sm:$0xf]
    %v428 = vld [vmem:[#allocation5 + $0x58] sm:$0xf]
    %v429 = vld [vmem:[#allocation5 + $0x5c] sm:$0xf]
    %v430 = vld [vmem:[#allocation5 + $0x60] sm:$0xf]
    %v431 = vld [vmem:[#allocation5 + $0x64] sm:$0xf]
    %v432 = vld [vmem:[#allocation5 + $0x68] sm:$0xf]
    %v433 = vld [vmem:[#allocation5 + $0x6c] sm:$0xf]
    %v434 = vld [vmem:[#allocation5 + $0x70] sm:$0xf]
    %v435 = vld [vmem:[#allocation5 + $0x74] sm:$0xf]
    %v436 = vld [vmem:[#allocation5 + $0x78] sm:$0xf]
    %v437 = vld [vmem:[#allocation5 + $0x7c] sm:$0xf]
    %v438 = vld [vmem:[%s6] sm:$0x1]
    %v440 = vlaneseq
    %v441 = vshrl.u32 %v440, 7
    %v442 = vsub.s32 0, %v441
    %v443 = vrot.slane %v438, %v442
    %v477 = vunpack.c.l.b16 %v406
    %v478 = vunpack.c.l.b16 %v407
    %v479 = vunpack.c.l.b16 %v408
    %v480 = vunpack.c.l.b16 %v409
    %v481 = vunpack.c.l.b16 %v410
    %v482 = vunpack.c.l.b16 %v411
    %v483 = vunpack.c.l.b16 %v412
    %v484 = vunpack.c.l.b16 %v413
    %v485 = vunpack.c.l.b16 %v414
    %v486 = vunpack.c.l.b16 %v415
    %v487 = vunpack.c.l.b16 %v416
    %v488 = vunpack.c.l.b16 %v417
    %v489 = vunpack.c.l.b16 %v418
    %v490 = vunpack.c.l.b16 %v419
    %v491 = vunpack.c.l.b16 %v420
    %v492 = vunpack.c.l.b16 %v421
    %v493 = vunpack.c.l.b16 %v422
    %v494 = vunpack.c.l.b16 %v423
    %v495 = vunpack.c.l.b16 %v424
    %v496 = vunpack.c.l.b16 %v425
    %v497 = vunpack.c.l.b16 %v426
    %v498 = vunpack.c.l.b16 %v427
    %v499 = vunpack.c.l.b16 %v428
    %v500 = vunpack.c.l.b16 %v429
    %v501 = vunpack.c.l.b16 %v430
    %v502 = vunpack.c.l.b16 %v431
    %v503 = vunpack.c.l.b16 %v432
    %v504 = vunpack.c.l.b16 %v433
    %v505 = vunpack.c.l.b16 %v434
    %v506 = vunpack.c.l.b16 %v435
    %v507 = vunpack.c.l.b16 %v436
    %v508 = vunpack.c.l.b16 %v437
    %v509 = vpack.c.b16 %v478, %v477
    %v510 = vpack.c.b16 %v480, %v479
    %v511 = vpack.c.b16 %v482, %v481
    %v512 = vpack.c.b16 %v484, %v483
    %v513 = vpack.c.b16 %v486, %v485
    %v514 = vpack.c.b16 %v488, %v487
    %v515 = vpack.c.b16 %v490, %v489
    %v516 = vpack.c.b16 %v492, %v491
    %v517 = vpack.c.b16 %v494, %v493
    %v518 = vpack.c.b16 %v496, %v495
    %v519 = vpack.c.b16 %v498, %v497
    %v520 = vpack.c.b16 %v500, %v499
    %v521 = vpack.c.b16 %v502, %v501
    %v522 = vpack.c.b16 %v504, %v503
    %v523 = vpack.c.b16 %v506, %v505
    %v524 = vpack.c.b16 %v508, %v507
    %541 = vmatprep.subr.bf16.mxu0 0
    %542 = vmatpush1.bf16.msra.mxu0 %v509
    %543 = vmatprep.subr.bf16.mxu0 0
    %544 = vmatpush1.bf16.msra.mxu0 %v510
    %545 = vmatprep.subr.bf16.mxu0 0
    %546 = vmatpush1.bf16.msra.mxu0 %v511
    %547 = vmatprep.subr.bf16.mxu0 0
    %548 = vmatpush1.bf16.msra.mxu0 %v512
    %549 = vmatprep.subr.bf16.mxu0 0
    %550 = vmatpush1.bf16.msra.mxu0 %v513
    %551 = vmatprep.subr.bf16.mxu0 0
    %552 = vmatpush1.bf16.msra.mxu0 %v514
    %553 = vmatprep.subr.bf16.mxu0 0
    %554 = vmatpush1.bf16.msra.mxu0 %v515
    %555 = vmatprep.subr.bf16.mxu0 0
    %556 = vmatpush1.bf16.msra.mxu0 %v516
    %557 = vmatprep.subr.bf16.mxu0 0
    %558 = vmatpush1.bf16.msra.mxu0 %v517
    %559 = vmatprep.subr.bf16.mxu0 0
    %560 = vmatpush1.bf16.msra.mxu0 %v518
    %561 = vmatprep.subr.bf16.mxu0 0
    %562 = vmatpush1.bf16.msra.mxu0 %v519
    %563 = vmatprep.subr.bf16.mxu0 0
    %564 = vmatpush1.bf16.msra.mxu0 %v520
    %565 = vmatprep.subr.bf16.mxu0 0
    %566 = vmatpush1.bf16.msra.mxu0 %v521
    %567 = vmatprep.subr.bf16.mxu0 0
    %568 = vmatpush1.bf16.msra.mxu0 %v522
    %569 = vmatprep.subr.bf16.mxu0 0
    %570 = vmatpush1.bf16.msra.mxu0 %v523
    %571 = vmatprep.subr.bf16.mxu0 0
    %572 = vmatpush1.bf16.msra.mxu0 %v524
    %573 = vmatprep.mubr.bf16.mxu0 %v405
    %574 = vmatmul.mubr.bf16.gmra.mrb[0].mxu0 %v404
    %v575 = vpop.f32.mrb[0].mxu0
    %v576 = vadd.f32 %v443, %v575
    %v577 = vpop.f32.mrb[0].mxu0
    %v578 = vpop.f32.mrb[0].mxu0
    %v579 = vpop.f32.mrb[0].mxu0
    %580 = vdwg.mxu0
    %v581 = vmax.f32 %v576, 0.0
    %v582 = vpack.c.bf16 %v581, %v581
    %v583 = vld [vmem:[#allocation7] sm:$0xf]
    %v584 = vld [vmem:[#allocation7 + $0x4] sm:$0xf]
    %v585 = vld [vmem:[#allocation7 + $0x8] sm:$0xf]
    %v586 = vld [vmem:[#allocation7 + $0xc] sm:$0xf]
    %v587 = vld [vmem:[#allocation7 + $0x10] sm:$0xf]
    %v588 = vld [vmem:[#allocation7 + $0x14] sm:$0xf]
    %v589 = vld [vmem:[#allocation7 + $0x18] sm:$0xf]
    %v590 = vld [vmem:[#allocation7 + $0x1c] sm:$0xf]
    %v591 = vld [vmem:[#allocation7 + $0x20] sm:$0xf]
    %v592 = vld [vmem:[#allocation7 + $0x24] sm:$0xf]
    %v593 = vld [vmem:[#allocation7 + $0x28] sm:$0xf]
    %v594 = vld [vmem:[#allocation7 + $0x2c] sm:$0xf]
    %v595 = vld [vmem:[#allocation7 + $0x30] sm:$0xf]
    %v596 = vld [vmem:[#allocation7 + $0x34] sm:$0xf]
    %v597 = vld [vmem:[#allocation7 + $0x38] sm:$0xf]
    %v598 = vld [vmem:[#allocation7 + $0x3c] sm:$0xf]
    %v599 = vld [vmem:[%s8] sm:$0x1]
    %v601 = vlaneseq
    %v602 = vshrl.u32 %v601, 7
    %v603 = vsub.s32 0, %v602
    %v604 = vrot.slane %v599, %v603
    %v622 = vunpack.c.l.b16 %v583
    %v623 = vunpack.c.l.b16 %v584
    %v624 = vunpack.c.l.b16 %v585
    %v625 = vunpack.c.l.b16 %v586
    %v626 = vunpack.c.l.b16 %v587
    %v627 = vunpack.c.l.b16 %v588
    %v628 = vunpack.c.l.b16 %v589
    %v629 = vunpack.c.l.b16 %v590
    %v630 = vunpack.c.l.b16 %v591
    %v631 = vunpack.c.l.b16 %v592
    %v632 = vunpack.c.l.b16 %v593
    %v633 = vunpack.c.l.b16 %v594
    %v634 = vunpack.c.l.b16 %v595
    %v635 = vunpack.c.l.b16 %v596
    %v636 = vunpack.c.l.b16 %v597
    %v637 = vunpack.c.l.b16 %v598
    %v638 = vpack.c.b16 %v623, %v622
    %v639 = vpack.c.b16 %v625, %v624
    %v640 = vpack.c.b16 %v627, %v626
    %v641 = vpack.c.b16 %v629, %v628
    %v642 = vpack.c.b16 %v631, %v630
    %v643 = vpack.c.b16 %v633, %v632
    %v644 = vpack.c.b16 %v635, %v634
    %v645 = vpack.c.b16 %v637, %v636
    %654 = vmatprep.subr.bf16.mxu0 0
    %655 = vmatpush1.bf16.msra.mxu0 %v638
    %656 = vmatprep.subr.bf16.mxu0 0
    %657 = vmatpush1.bf16.msra.mxu0 %v639
    %658 = vmatprep.subr.bf16.mxu0 0
    %659 = vmatpush1.bf16.msra.mxu0 %v640
    %660 = vmatprep.subr.bf16.mxu0 0
    %661 = vmatpush1.bf16.msra.mxu0 %v641
    %662 = vmatprep.subr.bf16.mxu0 0
    %663 = vmatpush1.bf16.msra.mxu0 %v642
    %664 = vmatprep.subr.bf16.mxu0 0
    %665 = vmatpush1.bf16.msra.mxu0 %v643
    %666 = vmatprep.subr.bf16.mxu0 0
    %667 = vmatpush1.bf16.msra.mxu0 %v644
    %668 = vmatprep.subr.bf16.mxu0 0
    %669 = vmatpush1.bf16.msra.mxu0 %v645
    %670 = vmatprep.subr.bf16.mxu0 0
    %671 = vmatpush1.bf16.msra.mxu0 0
    %672 = vmatprep.subr.bf16.mxu0 0
    %673 = vmatpush1.bf16.msra.mxu0 0
    %674 = vmatprep.subr.bf16.mxu0 0
    %675 = vmatpush1.bf16.msra.mxu0 0
    %676 = vmatprep.subr.bf16.mxu0 0
    %677 = vmatpush1.bf16.msra.mxu0 0
    %678 = vmatprep.subr.bf16.mxu0 0
    %679 = vmatpush1.bf16.msra.mxu0 0
    %680 = vmatprep.subr.bf16.mxu0 0
    %681 = vmatpush1.bf16.msra.mxu0 0
    %682 = vmatprep.subr.bf16.mxu0 0
    %683 = vmatpush1.bf16.msra.mxu0 0
    %684 = vmatprep.subr.bf16.mxu0 0
    %685 = vmatpush1.bf16.msra.mxu0 0
    %686 = vmatprep.mubr.bf16.mxu0 0
    %687 = vmatmul.mubr.bf16.gmra.mrb[0].mxu0 %v582
    %v688 = vpop.f32.mrb[0].mxu0
    %v689 = vadd.f32 %v604, %v688
    %v690 = vpop.f32.mrb[0].mxu0
    %v691 = vpop.f32.mrb[0].mxu0
    %v692 = vpop.f32.mrb[0].mxu0
    %693 = vdwg.mxu0
    %694 = vst [vmem:[#allocation8] sm:$0xff] %v689
    %v695 = vlaneseq
    %v696 = vand.u32 %v695, 127
    %vm697 = vcmp.lt.s32.totalorder %v696, 2
    %v698 = vsel %vm697, %v689, -3.4028235e+38
    %699 = vmax.xlane.f32.xlu0 %v698
    %v700 = vpop.xlane.xlu0 %699
    %vm701 = vcmp.eq.f32.partialorder %v698, %v700
    %v702 = vsel %vm701, %v696, 128
    %v703 = vand.u32 %v702, 65535
    %v704 = vshra.s32 %v702, 16
    %v705 = vcvt.s32.f32 %v703
    %v706 = vcvt.s32.f32 %v704
    %707 = vmin.xlane.f32.xlu0 %v706
    %v708 = vpop.xlane.xlu0 %707
    %vm709 = vcmp.eq.f32.partialorder %v706, %v708
    %v710 = vsel %vm709, %v705, inf
    %711 = vmin.xlane.f32.xlu0 %v710
    %v712 = vpop.xlane.xlu0 %711
    %v713 = vcvt.f32.s32 %v712
    %v714 = vcvt.f32.s32 %v708
    %v715 = vshll.u32 %v714, 16
    %v716 = vadd.s32 %v715, %v713
    %vm717 = vcmask 7168
    %718 = vst.msk [vmem:[%s10] sm:$0xff] %vm717, %v716
    // Predicated region
    $region50: #{tpu_custom_call.1} parent=1 // pred_check
      _
    $region51: #{tpu_custom_call.1} parent=1 // pred_check_branch
      %720 = sbr.rel (0) target = $region53
    $region52: #{tpu_custom_call.1} parent=1 // pred_region
      %s722 = ssub.s32 128, 128
      %723 = vsyncadd [#allocation4], %s722
      %s725 = sshll.u32 [#allocation8], 4
      %s726 = int_to_ptr.vmem [resolvable:$true] %s725
      %728 = dma.vmem_to_hbm [thread:$0]  %s726, 128, %s9, [#allocation4]
    $region53: #{tpu_custom_call.1} parent=1 // pred_fallthru
      _
    // Predicated region
    $region54: #{tpu_custom_call.1} parent=1 // pred_check
      _
    $region55: #{tpu_custom_call.1} parent=1 // pred_check_branch
      %730 = sbr.rel (0) target = $region57
    $region56: #{tpu_custom_call.1} parent=1 // pred_region
      _
    $region57: #{tpu_custom_call.1} parent=1 // pred_fallthru
      _
    // Predicated region
    $region58: #{tpu_custom_call.1} parent=1 // pred_check
      _
    $region59: #{tpu_custom_call.1} parent=1 // pred_check_branch
      %732 = sbr.rel (0) target = $region61
    $region60: #{tpu_custom_call.1} parent=1 // pred_region
      %733 = dma.done [#allocation4], 128
    $region61: #{tpu_custom_call.1} parent=1 // pred_fallthru
      _
    // Predicated region
    $region62: #{tpu_custom_call.1} parent=1 // pred_check
      _
    $region63: #{tpu_custom_call.1} parent=1 // pred_check_branch
      %735 = sbr.rel (0) target = $region65
    $region64: #{tpu_custom_call.1} parent=1 // pred_region
      _
    $region65: #{tpu_custom_call.1} parent=1 // pred_fallthru
      _
    %736 = vsyncpa [#allocation3], 1
    %737 = vsyncpa [#allocation6], 1
    %738 = vsyncpa [#allocation4], 1

</llo_original>
